<compile_context>
chip_gen: v7x
topology: tpu7x:2x2x1
jax: 0.10.0
libtpu: 0.0.40
codegen_flags: <defaults>
</compile_context>

<pallas_src>
import jax
import jax.numpy as jnp
from jax.experimental import pallas as pl
from jax.experimental.pallas import tpu as pltpu

BN_EPS = 1e-5                         # nn.BatchNorm2d default
VMEM_LIMIT_BYTES = 32 * 1024 * 1024   # safe on v5e/v6e (128 MiB) and v7x (64 MiB)


def _round_up(x, m):
    return (x + m - 1) // m * m


def _plan_tiles(n_groups, kernel_list, target_rows, n_chunks=2):
    """Shared group-tile size (multiple of 8), parallel chunk count, padded
    group count -- so every scale's row tile divides its padded row count."""
    k_max = max(kernel_list)
    tg = max(8, (target_rows // k_max) // 8 * 8)
    tg = min(tg, _round_up(n_groups, 8))
    if n_groups < n_chunks * tg:
        n_chunks = 1
    g_pad = _round_up(n_groups, n_chunks * tg)
    return tg, n_chunks, g_pad


# ----------------------------------------------------------------------------
# Pallas kernel 1: [prev-layer folded BN affine + ReLU] -> matmul -> one-pass
#                  per-channel sum / sum-of-squares accumulation.
# ----------------------------------------------------------------------------
def _make_layer_kernel(has_affine, needs_mask, valid_rows, tile_rows, t_inner,
                       mxu_dtype):
    def kernel(*refs):
        if has_affine:
            x_ref, sc_ref, sh_ref, w_ref, z_ref, stats_ref = refs
        else:
            x_ref, w_ref, z_ref, stats_ref = refs
        c = pl.program_id(0)
        t = pl.program_id(1)
        x = x_ref[...]
        if has_affine:
            # Folded BN affine of the previous layer + ReLU (f32 on VPU;
            # bf16 * f32 promotes to f32).
            h = jnp.maximum(x * sc_ref[...] + sh_ref[...], 0.0)
            if needs_mask:
                # Keep zero-padded rows at exactly zero so they do not pollute
                # this layer's batch statistics.
                row0 = (c * t_inner + t) * tile_rows
                rows = row0 + jax.lax.broadcasted_iota(jnp.int32, h.shape, 0)
                h = jnp.where(rows < valid_rows, h, 0.0)
        else:
            h = x
        # 1x1 Conv2d == matmul over the channel axis (MXU, f32 accumulate).
        z = jnp.dot(h.astype(mxu_dtype), w_ref[...],
                    preferred_element_type=jnp.float32)
        z_ref[...] = z.astype(z_ref.dtype)
        # One-pass BatchNorm statistics (f32): per-channel sum and sum-squares.
        ssum = jnp.sum(z, axis=0, keepdims=True)
        ssq = jnp.sum(z * z, axis=0, keepdims=True)
        part = jnp.concatenate([ssum, ssq], axis=0)          # [2, Cout]

        @pl.when(t == 0)
        def _():
            stats_ref[...] = jnp.zeros_like(stats_ref)

        stats_ref[...] += part[None]
    return kernel


def _layer_call(x, w, scale, shift, *, valid_rows, tile_rows, n_chunks,
                mxu_dtype):
    p_pad, c_in = x.shape
    c_out = w.shape[1]
    t_inner = p_pad // (n_chunks * tile_rows)
    has_affine = scale is not None
    needs_mask = has_affine and (valid_rows < p_pad)
    kernel = _make_layer_kernel(has_affine, needs_mask, valid_rows, tile_rows,
                                t_inner, mxu_dtype)

    row_map = lambda c, t: (c * t_inner + t, 0)
    vec_map = lambda c, t: (0, 0)
    in_specs = [pl.BlockSpec((tile_rows, c_in), row_map)]
    args = [x]
    if has_affine:
        in_specs += [pl.BlockSpec((1, c_in), vec_map),
                     pl.BlockSpec((1, c_in), vec_map)]
        args += [scale, shift]
    in_specs.append(pl.BlockSpec((c_in, c_out), vec_map))
    args.append(w.astype(mxu_dtype))

    z, stats = pl.pallas_call(
        kernel,
        grid=(n_chunks, t_inner),
        in_specs=in_specs,
        out_specs=(pl.BlockSpec((tile_rows, c_out), row_map),
                   pl.BlockSpec((1, 2, c_out), lambda c, t: (c, 0, 0))),
        out_shape=(jax.ShapeDtypeStruct((p_pad, c_out), mxu_dtype),
                   jax.ShapeDtypeStruct((n_chunks, 2, c_out), jnp.float32)),
        compiler_params=pltpu.CompilerParams(
            dimension_semantics=("parallel", "arbitrary"),
            vmem_limit_bytes=VMEM_LIMIT_BYTES),
    )(*args)
    return z, stats


def _bn_affine(stats, gamma, beta, n_valid):
    """Fold training-mode BN (biased batch stats) into per-channel scale/shift."""
    s = jnp.sum(stats, axis=0)               # combine per-chunk partials [2, C]
    inv_n = 1.0 / float(n_valid)
    mean = s[0:1] * inv_n                     # [1, C]
    var = s[1:2] * inv_n - mean * mean        # biased variance
    scale = gamma * jax.lax.rsqrt(var + BN_EPS)
    shift = beta - mean * scale
    return scale, shift


def scale_mlp_pipeline(x_flat, layer_params, *, valid_rows, tile_rows, n_chunks,
                       mxu_dtype):
    """Per-scale MLP.  Returns the last layer's pre-BN output `z` plus its
    folded (scale, shift) so the caller can fuse BN+ReLU+max(K) downstream."""
    h = x_flat
    scale = shift = None
    for j, (w, _b, gamma, beta) in enumerate(layer_params):
        # conv bias `_b` is cancelled exactly by BN's mean subtraction -> drop.
        if j == 0 and w.shape[0] < h.shape[1]:
            # input channels were zero-padded to 8 lanes; pad weight rows too
            w = jnp.pad(w, ((0, h.shape[1] - w.shape[0]), (0, 0)))
        z, stats = _layer_call(h, w, scale, shift, valid_rows=valid_rows,
                               tile_rows=tile_rows, n_chunks=n_chunks,
                               mxu_dtype=mxu_dtype)
        scale, shift = _bn_affine(stats, gamma, beta, valid_rows)
        h = z
    return h, scale, shift


# ----------------------------------------------------------------------------
# Pallas kernel 2: fused (BN affine + ReLU + max over K) for ALL scales, writing
# one lane-dense [B*S, sum(C_last)] output (no host-side concat).
# ----------------------------------------------------------------------------
def _make_final_kernel(n_scales):
    def kernel(*refs):
        out_ref = refs[-1]
        parts = []
        for s in range(n_scales):
            z_ref, sc_ref, sh_ref = refs[3 * s: 3 * s + 3]
            h = jnp.maximum(z_ref[...] * sc_ref[...] + sh_ref[...], 0.0)
            parts.append(jnp.max(h, axis=1))          # max over K neighbors
        out = parts[0] if n_scales == 1 else jnp.concatenate(parts, axis=-1)
        out_ref[...] = out
    return kernel


def fused_bn_relu_max(z_list, scale_list, shift_list, kernel_list, *, g_pad, tg):
    c_list = [z.shape[-1] for z in z_list]
    c_total = sum(c_list)
    in_specs, args = [], []
    for z, sc, sh, k, c in zip(z_list, scale_list, shift_list, kernel_list,
                               c_list):
        in_specs += [pl.BlockSpec((tg, k, c), lambda g: (g, 0, 0)),
                     pl.BlockSpec((1, c), lambda g: (0, 0)),
                     pl.BlockSpec((1, c), lambda g: (0, 0))]
        args += [z.reshape(g_pad, k, c), sc, sh]
    return pl.pallas_call(
        _make_final_kernel(len(z_list)),
        grid=(g_pad // tg,),
        in_specs=in_specs,
        out_specs=pl.BlockSpec((tg, c_total), lambda g: (g, 0)),
        out_shape=jax.ShapeDtypeStruct((g_pad, c_total), jnp.float32),
        compiler_params=pltpu.CompilerParams(
            dimension_semantics=("parallel",),
            vmem_limit_bytes=VMEM_LIMIT_BYTES),
    )(*args)


# ----------------------------------------------------------------------------
# Plain-JAX glue: farthest point sampling + gathers (argsort-based, not Pallas).
# ----------------------------------------------------------------------------
def farthest_point_sample(xyz, npoint, key, cut=128):
    B, N, _ = xyz.shape
    cut = min(cut, N)
    distance = jnp.full((B, N), 1e10, dtype=jnp.float32)
    farthest = jax.random.randint(key, (B,), 0, N)   # torch.randint seed point
    batch_idx = jnp.arange(B)
    centroids, dist_idx_all = [], []
    for _ in range(npoint):
        centroids.append(farthest)
        centroid = xyz[batch_idx, farthest][:, None, :]          # [B,1,3]
        dist = jnp.sum((xyz - centroid) ** 2, axis=-1)           # [B,N]
        dist_idx_all.append(jnp.argsort(dist, axis=1)[:, :cut])
        mask = dist < distance
        # Deliberate bug-compat: the reference keeps `distance` in a long
        # tensor, so float distances are truncated on assignment.
        distance = jnp.where(mask, jnp.floor(dist), distance)
        farthest = jnp.argmax(distance, axis=-1)
    return jnp.stack(centroids, axis=1), jnp.stack(dist_idx_all, axis=1)


def index_points(points, idx):
    # points: [B, N, C]; idx: [B, ...] -> [B, ..., C]
    return jax.vmap(lambda p, i: p[i])(points, idx)


def init_params(key, in_channel, mlp_list):
    params = []
    for mlp in mlp_list:
        last = in_channel + 3
        layers = []
        for out_c in mlp:
            key, k1, k2, k3, k4 = jax.random.split(key, 5)
            w = 0.1 * jax.random.normal(k1, (last, out_c), jnp.float32)    # conv W.T
            b = 0.1 * jax.random.normal(k2, (1, out_c), jnp.float32)       # conv bias
            g = 1.0 + 0.1 * jax.random.normal(k3, (1, out_c), jnp.float32)  # BN gamma
            beta = 0.1 * jax.random.normal(k4, (1, out_c), jnp.float32)     # BN beta
            layers.append((w, b, g, beta))
            last = out_c
        params.append(layers)
    return params


# ----------------------------------------------------------------------------
# PointFeatureNet forward (attention=False path)
# ----------------------------------------------------------------------------
def point_feature_net_forward(xyz, features, params, n_points, kernel_list,
                              fps_key, *, use_pallas=True,
                              mxu_dtype=jnp.bfloat16, target_rows=2048):
    xyz = xyz.astype(jnp.float32)
    B, N, _ = xyz.shape
    centroids, dist_idx_all = farthest_point_sample(xyz, n_points, fps_key)
    xyz_new = index_points(xyz, centroids)                         # [B, S, 3]

    # Gather neighbors ONCE at the largest K; smaller K's are prefixes.
    k_max = max(kernel_list)
    idx_max = dist_idx_all[..., :k_max]                            # [B, S, Kmax]
    grouped_xyz = index_points(xyz, idx_max)                       # [B, S, Kmax, 3]
    if features is not None:
        grouped_all = jnp.concatenate(
            [index_points(features, idx_max), grouped_xyz], axis=-1)
    else:
        grouped_all = grouped_xyz
    S = n_points
    G = B * S
    c0 = grouped_all.shape[-1]

    if not use_pallas:
        # Pure-JAX reference with the original module math (incl. conv bias,
        # two-pass batch statistics).
        feats = []
        for i, kern in enumerate(kernel_list):
            h = grouped_all[:, :, :kern, :].reshape(G * kern, c0)
            for (w, b, gamma, beta) in params[i]:
                z = h @ w + b
                mean = z.mean(axis=0, keepdims=True)
                var = ((z - mean) ** 2).mean(axis=0, keepdims=True)
                h = jnp.maximum(
                    (z - mean) * jax.lax.rsqrt(var + BN_EPS) * gamma + beta, 0.0)
            feats.append(h.reshape(G, kern, -1).max(axis=1))
        feat = jnp.concatenate(feats, axis=-1).reshape(B, S, -1)
        return xyz_new, feat

    c0_pad = _round_up(c0, 8)
    tg, n_chunks, g_pad = _plan_tiles(G, kernel_list, target_rows)
    z_list, sc_list, sh_list = [], [], []
    for i, kern in enumerate(kernel_list):
        x = grouped_all[:, :, :kern, :].reshape(G, kern, c0)
        # Pad channels to a multiple of 8 lanes and groups to the tile grid;
        # store in mxu_dtype (bf16 by default) to halve HBM read traffic.
        x = jnp.pad(x, ((0, g_pad - G), (0, 0), (0, c0_pad - c0)))
        x_flat = x.reshape(g_pad * kern, c0_pad).astype(mxu_dtype)
        z, sc, sh = scale_mlp_pipeline(
            x_flat, params[i], valid_rows=G * kern, tile_rows=tg * kern,
            n_chunks=n_chunks, mxu_dtype=mxu_dtype)
        z_list.append(z)
        sc_list.append(sc)
        sh_list.append(sh)
    out = fused_bn_relu_max(z_list, sc_list, sh_list, kernel_list,
                            g_pad=g_pad, tg=tg)
    feat = out[:G].reshape(B, S, -1)
    return xyz_new, feat


if __name__ == "__main__":
    key = jax.random.PRNGKey(0)
    k_xyz, k_feat, k_params, k_fps = jax.random.split(key, 4)

    # Small but non-trivial shapes: exercises multiple row tiles, 2 parallel
    # chunks, group padding (B*S=72 -> 80) and both scales.
    B, N, D = 2, 256, 4
    n_points = 36
    kernel_list = [8, 16]
    mlp_list = [[32, 32, 64], [32, 48, 64]]

    xyz = jax.random.normal(k_xyz, (B, N, 3), jnp.float32)
    features = jax.random.normal(k_feat, (B, N, D), jnp.float32)
    params = init_params(k_params, D, mlp_list)

    # Pallas path with f32 MXU operands / f32 activations: tight check of the
    # kernel logic.
    xyz_new, feat_f32 = point_feature_net_forward(
        xyz, features, params, n_points, kernel_list, k_fps,
        use_pallas=True, mxu_dtype=jnp.float32, target_rows=128)
    # Pallas path with bf16 MXU operands + bf16 inter-layer activations: the
    # perf default (v6e / v7x MXU, half the HBM traffic).
    _, feat_bf16 = point_feature_net_forward(
        xyz, features, params, n_points, kernel_list, k_fps,
        use_pallas=True, mxu_dtype=jnp.bfloat16, target_rows=128)
    jax.block_until_ready((xyz_new, feat_f32, feat_bf16))

    # Pure-JAX reference of the original module math.
    xyz_ref, feat_ref = point_feature_net_forward(
        xyz, features, params, n_points, kernel_list, k_fps, use_pallas=False)

    c_total = sum(m[-1] for m in mlp_list)
    assert xyz_new.shape == (B, n_points, 3)
    assert feat_f32.shape == (B, n_points, c_total)
    assert feat_bf16.shape == (B, n_points, c_total)
    assert jnp.allclose(xyz_new, xyz_ref, rtol=1e-5, atol=1e-5)
    assert jnp.allclose(feat_f32, feat_ref, rtol=1e-3, atol=1e-3), (
        float(jnp.max(jnp.abs(feat_f32 - feat_ref))))
    assert jnp.allclose(feat_bf16, feat_ref, rtol=5e-2, atol=5e-2), (
        float(jnp.max(jnp.abs(feat_bf16 - feat_ref))))
    print("KERNEL_OK")
</pallas_src>

<mosaic_0001>
module attributes {stable_mosaic.version = 11 : i64} {
  func.func @kernel(%arg0: i32, %arg1: i32, %arg2: memref<64x8xf32, #tpu.memory_space<vmem>>, %arg3: memref<8x32xf32, #tpu.memory_space<vmem>>, %arg4: memref<64x32xf32, #tpu.memory_space<vmem>>, %arg5: memref<1x2x32xf32, #tpu.memory_space<vmem>>) attributes {dimension_semantics = [#tpu.dimension_semantics<parallel>, #tpu.dimension_semantics<arbitrary>], iteration_bounds = array<i64: 2, 5>, scalar_prefetch = 0 : i64, scratch_operands = 0 : i64, tpu.core_type = #tpu.core_type<tc>, window_params = [{transform_indices = @transform_0, window_bounds = array<i64: 64, 8>}, {pipeline_mode = #tpu.pipeline_mode<synchronous>, transform_indices = @transform_1, window_bounds = array<i64: 8, 32>}, {transform_indices = @transform_2, window_bounds = array<i64: 64, 32>}, {transform_indices = @transform_3, window_bounds = array<i64: 1, 2, 32>}]} {
    %c0 = arith.constant 0 : index
    %c0_0 = arith.constant 0 : index
    %0 = vector.load %arg2[%c0, %c0_0] : memref<64x8xf32, #tpu.memory_space<vmem>>, vector<64x8xf32>
    %c0_1 = arith.constant 0 : index
    %c0_2 = arith.constant 0 : index
    %1 = vector.load %arg3[%c0_1, %c0_2] : memref<8x32xf32, #tpu.memory_space<vmem>>, vector<8x32xf32>
    %cst = arith.constant dense<0.000000e+00> : vector<64x32xf32>
    %2 = tpu.matmul %0, %1, %cst {dimension_numbers = #tpu.dot_dimension_numbers<[1], [0], [0], [1], [0, 0, 1, 1], [], []>} : vector<64x8xf32>, vector<8x32xf32>, vector<64x32xf32> -> vector<64x32xf32>
    %c0_3 = arith.constant 0 : index
    %c0_4 = arith.constant 0 : index
    %3 = vector.load %arg4[%c0_3, %c0_4] : memref<64x32xf32, #tpu.memory_space<vmem>>, vector<64x32xf32>
    tpu.vector_store %arg4[%c0_3, %c0_4], %2 {strides = array<i32>} : memref<64x32xf32, #tpu.memory_space<vmem>>, vector<64x32xf32>,
    %cst_5 = arith.constant dense<0.000000e+00> : vector<32xf32>
    %4 = vector.multi_reduction <add>, %2, %cst_5 [0] : vector<64x32xf32> to vector<32xf32>
    %5 = vector.shape_cast %4 : vector<32xf32> to vector<1x32xf32>
    %6 = arith.mulf %2, %2 : vector<64x32xf32>
    %cst_6 = arith.constant dense<0.000000e+00> : vector<32xf32>
    %7 = vector.multi_reduction <add>, %6, %cst_6 [0] : vector<64x32xf32> to vector<32xf32>
    %8 = vector.shape_cast %7 : vector<32xf32> to vector<1x32xf32>
    %9 = tpu.concatenate %5, %8 in 0 : vector<1x32xf32>, vector<1x32xf32> -> vector<2x32xf32>
    %c0_i32 = arith.constant 0 : i32
    %10 = arith.cmpi eq, %arg1, %c0_i32 : i32
    %11 = arith.extui %10 : i1 to i32
    %c0_i32_7 = arith.constant 0 : i32
    %12 = arith.cmpi ne, %11, %c0_i32_7 : i32
    scf.if %12 {
      %cst_14 = arith.constant 0.000000e+00 : f32
      %17 = vector.broadcast %cst_14 : f32 to vector<1x2x32xf32>
      %c0_15 = arith.constant 0 : index
      %c0_16 = arith.constant 0 : index
      %c0_17 = arith.constant 0 : index
      %18 = vector.load %arg5[%c0_15, %c0_16, %c0_17] : memref<1x2x32xf32, #tpu.memory_space<vmem>>, vector<1x2x32xf32>
      tpu.vector_store %arg5[%c0_15, %c0_16, %c0_17], %17 {strides = array<i32>} : memref<1x2x32xf32, #tpu.memory_space<vmem>>, vector<1x2x32xf32>,
    } else {
    }
    %c0_8 = arith.constant 0 : index
    %c0_9 = arith.constant 0 : index
    %c0_10 = arith.constant 0 : index
    %13 = vector.load %arg5[%c0_8, %c0_9, %c0_10] : memref<1x2x32xf32, #tpu.memory_space<vmem>>, vector<1x2x32xf32>
    %14 = vector.shape_cast %9 : vector<2x32xf32> to vector<1x2x32xf32>
    %15 = arith.addf %13, %14 : vector<1x2x32xf32>
    %c0_11 = arith.constant 0 : index
    %c0_12 = arith.constant 0 : index
    %c0_13 = arith.constant 0 : index
    %16 = vector.load %arg5[%c0_11, %c0_12, %c0_13] : memref<1x2x32xf32, #tpu.memory_space<vmem>>, vector<1x2x32xf32>
    tpu.vector_store %arg5[%c0_11, %c0_12, %c0_13], %15 {strides = array<i32>} : memref<1x2x32xf32, #tpu.memory_space<vmem>>, vector<1x2x32xf32>,
    return
  }
  func.func @transform_0(%arg0: i32, %arg1: i32) -> (i32, i32) {
    %c5_i32 = arith.constant 5 : i32
    %0 = arith.muli %arg0, %c5_i32 : i32
    %1 = arith.addi %0, %arg1 : i32
    %c0_i32 = arith.constant 0 : i32
    %c0_i32_0 = arith.constant 0 : i32
    return %1, %c0_i32 : i32, i32
  }
  func.func @transform_1(%arg0: i32, %arg1: i32) -> (i32, i32) {
    %c0_i32 = arith.constant 0 : i32
    %c0_i32_0 = arith.constant 0 : i32
    %c0_i32_1 = arith.constant 0 : i32
    return %c0_i32, %c0_i32_0 : i32, i32
  }
  func.func @transform_2(%arg0: i32, %arg1: i32) -> (i32, i32) {
    %c5_i32 = arith.constant 5 : i32
    %0 = arith.muli %arg0, %c5_i32 : i32
    %1 = arith.addi %0, %arg1 : i32
    %c0_i32 = arith.constant 0 : i32
    %c0_i32_0 = arith.constant 0 : i32
    return %1, %c0_i32 : i32, i32
  }
  func.func @transform_3(%arg0: i32, %arg1: i32) -> (i32, i32, i32) {
    %c0_i32 = arith.constant 0 : i32
    %c0_i32_0 = arith.constant 0 : i32
    %c0_i32_1 = arith.constant 0 : i32
    return %arg0, %c0_i32, %c0_i32_0 : i32, i32, i32
  }
}

</mosaic_0001>

<llo_original>
// kernel: tpu_custom_call.1
$region0: #{tpu_custom_call.1}
  #allocation0 [shape = 'u32[]', space=smem, size = 0x4, offset = 0x4, fixed_abs, tag = 'smem constant byte address 0x4 - core index']
  #allocation1 [shape = 'u32[144,128]{1,0:T(1,128)}', space=vmem, size = 0x12000, scoped, tag = 'internal scratch']
  %s0 = inlined_call_operand.vmem [shape: f32[640,8], index: 0, kind: input, shape index: {}]
  %s1 = inlined_call_operand.vmem [shape: f32[8,32], index: 1, kind: input, shape index: {}]
  %s2 = inlined_call_operand.vmem [shape: f32[640,32], index: 2, kind: output, shape index: {0}]
  %s3 = inlined_call_operand.hbm [shape: f32[2,2,32], index: 3, kind: output, shape index: {1}]
  %4 = xla_tuple %s2, %s3
  %s5 = sld [smem:[#allocation0]]
  $region53: #{tpu_custom_call.1} parent=0
    _
  %s7 = ssub.s32 1, %s5
  %s8 = scalar_select 0, %s7, %s5
  $region1: #{tpu_custom_call.1} parent=0
    #allocation2 [shape = 'u8[2048]{0}', space=vmem, size = 0x800, scoped, tag = 'output window, operand 1']
    #allocation3 [shape = 's32[2]{0}', space=sflag, size = 0x8, scoped, tag = 'scoped memory for tpu_custom_call.1']
    %9 = vsyncpa [#allocation3], 0
    %s10 = scalar_lea.sflag [#allocation3], 1
    %11 = vsyncpa %s10, 0
    loop: start=0, step=1, limit=12
    $region2: #{tpu_custom_call.1} parent=1 // loop_pre_header
      _
    $region3: #{tpu_custom_call.1} parent=1 // loop_header
      %s13 = sphi 0, %s17
      %p14 = scmp.ge.s32.totalorder %s13, 12
      %s20 = sphi 0, %s32
      %s21 = sphi 0, %s28
      %s22 = sphi 0, %s20
      %s23 = sphi 0, %s21
      %s24 = sphi 0, %s22
      %s25 = sphi 0, %s23
      %s39 = sphi 0, %s41
      %s42 = sphi 0, %s39
      %s43 = sphi 0, %s42
      %s59 = sphi 0, %s43
      %s63 = sphi 0, %s63
      %s65 = sphi 0, %s63
      %s66 = sphi 0, %s65
      %s80 = sphi 0, %s66
      %s90 = sphi 0, %s92
      %s93 = sphi 0, %s90
      %s94 = sphi 0, %s93
      %s110 = sphi 0, %s94
      %s116 = sphi 0, %s118
      %s119 = sphi 0, %s116
      %s120 = sphi 0, %s119
      %s136 = sphi 0, %s120
    $region4: #{tpu_custom_call.1} parent=1 // loop_header_branch
      %16 = sbr.rel (%p14) target = $region8
    $region5: #{tpu_custom_call.1} parent=1 // loop_body
      %s18 = ssub.s32 %s13, 1
      %s19 = ssub.s32 %s13, 2
      %s26 = sadd.s32 1, %s21
      %p27 = scmp.ge.s32.totalorder %s26, 5
      %s28 = scalar_select %p27, 0, %s26
      %s29 = sadd.s32 1, %s20
      %s30 = scalar_select %p27, %s29, %s20
      %p31 = scmp.ge.s32.totalorder %s30, 2
      %s32 = scalar_select %p31, 0, %s30
      %s33 = smul.u32 %s20, 5
      %s34 = sadd.s32 %s33, %s21
      %s35 = smul.u32 %s32, 5
      %s36 = sadd.s32 %s35, %s28
      %s37 = ssub.s32 %s34, %s36
      %p38 = scmp.eq.s32.totalorder %s37, 0
      %s40 = sadd.s32 %s39, 1
      %s41 = scalar_select %p38, %s39, %s40
      %p44 = pneg %p38
      %p45 = scmp.eq.s32.totalorder %s13, 9
      %p46 = por %p44, %p45
      %p47 = scmp.ne.s32.totalorder %s39, %s42
      %p48 = scmp.eq.s32.totalorder %s13, 0
      %p49 = por %p47, %p48
      %p50 = scmp.ne.s32.totalorder %s39, %s42
      %p51 = scmp.eq.s32.totalorder %s18, 9
      %p52 = por %p50, %p51
      %p53 = scmp.ne.s32.totalorder %s42, %s43
      %p54 = scmp.eq.s32.totalorder %s18, 0
      %p55 = por %p53, %p54
      %p56 = scmp.ne.s32.totalorder %s42, %s43
      %p57 = scmp.eq.s32.totalorder %s19, 9
      %p58 = por %p56, %p57
      %p60 = scmp.ne.s32.totalorder %s43, %s59
      %p61 = scmp.eq.s32.totalorder %s19, 0
      %p62 = por %p60, %p61
      %s64 = sadd.s32 %s63, 1
      %p67 = scmp.eq.s32.totalorder %s13, 9
      %p68 = scmp.ne.s32.totalorder %s63, %s65
      %p69 = scmp.eq.s32.totalorder %s13, 0
      %p70 = por %p68, %p69
      %p71 = scmp.ne.s32.totalorder %s63, %s65
      %p72 = scmp.eq.s32.totalorder %s18, 9
      %p73 = por %p71, %p72
      %p74 = scmp.ne.s32.totalorder %s65, %s66
      %p75 = scmp.eq.s32.totalorder %s18, 0
      %p76 = por %p74, %p75
      %p77 = scmp.ne.s32.totalorder %s65, %s66
      %p78 = scmp.eq.s32.totalorder %s19, 9
      %p79 = por %p77, %p78
      %p81 = scmp.ne.s32.totalorder %s66, %s80
      %p82 = scmp.eq.s32.totalorder %s19, 0
      %p83 = por %p81, %p82
      %s84 = smul.u32 %s20, 5
      %s85 = sadd.s32 %s84, %s21
      %s86 = smul.u32 %s32, 5
      %s87 = sadd.s32 %s86, %s28
      %s88 = ssub.s32 %s85, %s87
      %p89 = scmp.eq.s32.totalorder %s88, 0
      %s91 = sadd.s32 %s90, 1
      %s92 = scalar_select %p89, %s90, %s91
      %p95 = pneg %p89
      %p96 = scmp.eq.s32.totalorder %s13, 9
      %p97 = por %p95, %p96
      %p98 = scmp.ne.s32.totalorder %s90, %s93
      %p99 = scmp.eq.s32.totalorder %s13, 0
      %p100 = por %p98, %p99
      %p101 = scmp.ne.s32.totalorder %s90, %s93
      %p102 = scmp.eq.s32.totalorder %s18, 9
      %p103 = por %p101, %p102
      %p104 = scmp.ne.s32.totalorder %s93, %s94
      %p105 = scmp.eq.s32.totalorder %s18, 0
      %p106 = por %p104, %p105
      %p107 = scmp.ne.s32.totalorder %s93, %s94
      %p108 = scmp.eq.s32.totalorder %s19, 9
      %p109 = por %p107, %p108
      %p111 = scmp.ne.s32.totalorder %s94, %s110
      %p112 = scmp.eq.s32.totalorder %s19, 0
      %p113 = por %p111, %p112
      %s114 = ssub.s32 %s20, %s32
      %p115 = scmp.eq.s32.totalorder %s114, 0
      %s117 = sadd.s32 %s116, 1
      %s118 = scalar_select %p115, %s116, %s117
      %p121 = pneg %p115
      %p122 = scmp.eq.s32.totalorder %s13, 9
      %p123 = por %p121, %p122
      %p124 = scmp.ne.s32.totalorder %s116, %s119
      %p125 = scmp.eq.s32.totalorder %s13, 0
      %p126 = por %p124, %p125
      %p127 = scmp.ne.s32.totalorder %s116, %s119
      %p128 = scmp.eq.s32.totalorder %s18, 9
      %p129 = por %p127, %p128
      %p130 = scmp.ne.s32.totalorder %s119, %s120
      %p131 = scmp.eq.s32.totalorder %s18, 0
      %p132 = por %p130, %p131
      %p133 = scmp.ne.s32.totalorder %s119, %s120
      %p134 = scmp.eq.s32.totalorder %s19, 9
      %p135 = por %p133, %p134
      %p137 = scmp.ne.s32.totalorder %s120, %s136
      %p138 = scmp.eq.s32.totalorder %s19, 0
      %p139 = por %p137, %p138
      %p140 = scmp.le.s32.totalorder 1, %s13
      %p141 = scmp.lt.s32.totalorder %s13, 11
      %p142 = pnand %p140, %p141
      %p143 = pneg %p142
      // Predicated region
      $region9: #{tpu_custom_call.1} parent=5 // pred_check
        _
      $region10: #{tpu_custom_call.1} parent=5 // pred_check_branch
        %145 = sbr.rel (%p142) target = $region12
      $region11: #{tpu_custom_call.1} parent=5 // pred_region
        %s146 = ssub.s32 %s13, 1
        // Predicated region
        $region13: #{tpu_custom_call.1} parent=11 // pred_check
          %p147 = pneg %p76
        $region14: #{tpu_custom_call.1} parent=11 // pred_check_branch
          %149 = sbr.rel (%p147) target = $region16
        $region15: #{tpu_custom_call.1} parent=11 // pred_region
          _
        $region16: #{tpu_custom_call.1} parent=11 // pred_fallthru
          _
      $region12: #{tpu_custom_call.1} parent=5 // pred_fallthru
        _
      %p150 = scmp.lt.s32.totalorder %s13, 10
      // Predicated region
      $region17: #{tpu_custom_call.1} parent=5 // pred_check
        %p151 = pneg %p150
      $region18: #{tpu_custom_call.1} parent=5 // pred_check_branch
        %153 = sbr.rel (%p151) target = $region20
      $region19: #{tpu_custom_call.1} parent=5 // pred_region
        // Predicated region
        $region21: #{tpu_custom_call.1} parent=19 // pred_check
          %p154 = pneg %p49
        $region22: #{tpu_custom_call.1} parent=19 // pred_check_branch
          %156 = sbr.rel (%p154) target = $region24
        $region23: #{tpu_custom_call.1} parent=19 // pred_region
          %s157 = smul.u32 %s20, 5
          %s158 = sadd.s32 %s157, %s21
          %s159 = smul.u32 8, %s158
          %p160 = scmp.lt.s32.totalorder %s159, 79
          %s161 = scalar_select %p160, %s159, 79
          %s162 = smul.addr %s161, 8
          %s163 = scalar_lea.vmem %s0, %s162
          %s164 = smul.u32 %s20, 5
          %s165 = sadd.s32 %s164, %s21
          %s166 = smul.u32 8, %s165
        $region24: #{tpu_custom_call.1} parent=19 // pred_fallthru
          _
      $region20: #{tpu_custom_call.1} parent=5 // pred_fallthru
        _
      %p167 = scmp.le.s32.totalorder 1, %s13
      %p168 = scmp.lt.s32.totalorder %s13, 11
      %p169 = pnand %p167, %p168
      %p170 = pneg %p169
      // Predicated region
      $region25: #{tpu_custom_call.1} parent=5 // pred_check
        _
      $region26: #{tpu_custom_call.1} parent=5 // pred_check_branch
        %172 = sbr.rel (%p169) target = $region28
      $region27: #{tpu_custom_call.1} parent=5 // pred_region
        %s173 = ssub.s32 %s13, 1
        %s174 = smul.u32 %s22, 5
        %s175 = sadd.s32 %s174, %s23
        %s176 = smul.u32 8, %s175
        %p177 = scmp.lt.s32.totalorder %s176, 79
        %s178 = scalar_select %p177, %s176, 79
        %s179 = smul.addr %s178, 8
        %s180 = scalar_lea.vmem %s0, %s179
        %p181 = pneg %p55
        %p182 = pneg %p52
        %p183 = pneg %p76
        %p184 = pneg %p73
        %p185 = pneg %p106
        %p186 = pneg %p103
        %s187 = smul.u32 %s22, 5
        %s188 = sadd.s32 %s187, %s23
        %s189 = smul.u32 8, %s188
        %p190 = scmp.lt.s32.totalorder %s189, 79
        %s191 = scalar_select %p190, %s189, 79
        %s192 = smul.addr %s191, 8
        %s193 = scalar_lea.vmem %s2, %s192
        %p194 = pneg %p132
        %p195 = pneg %p129
        %s196 = sand.u32 %s119, 1
        %s197 = scalar_lea.sflag [#allocation3], %s196
        %s198 = sand.u32 %s119, 1
        %s199 = smul.addr %s198, 2
        %s200 = scalar_lea.vmem [#allocation2], %s199
        %s201 = smul.u32 %s22, 5
        %s202 = sadd.s32 %s201, %s23
        %s203 = smul.u32 8, %s202
        %p204 = scmp.lt.s32.totalorder %s203, 79
        %s205 = scalar_select %p204, %s203, 79
        %s206 = smul.addr %s205, 8
        %s207 = scalar_lea.vmem %s0, %s206
        %s208 = smul.u32 %s22, 5
        %s209 = sadd.s32 %s208, %s23
        %s210 = smul.u32 8, %s209
        %s211 = smul.u32 %s22, 5
        %s212 = sadd.s32 %s211, %s23
        %s213 = smul.u32 8, %s212
        %p214 = scmp.lt.s32.totalorder %s213, 79
        %s215 = scalar_select %p214, %s213, 79
        %s216 = smul.addr %s215, 8
        %s217 = scalar_lea.vmem %s2, %s216
        %s218 = smul.u32 %s22, 5
        %s219 = sadd.s32 %s218, %s23
        %s220 = smul.u32 8, %s219
        %v221 = vld [vmem:[%s207] sm:$0xff]
        %v222 = vld [vmem:[%s207 + $0x8] sm:$0xff]
        %v223 = vld [vmem:[%s207 + $0x10] sm:$0xff]
        %v224 = vld [vmem:[%s207 + $0x18] sm:$0xff]
        %v225 = vld [vmem:[%s207 + $0x20] sm:$0xff]
        %v226 = vld [vmem:[%s207 + $0x28] sm:$0xff]
        %v227 = vld [vmem:[%s207 + $0x30] sm:$0xff]
        %v228 = vld [vmem:[%s207 + $0x38] sm:$0xff]
        %v229 = vld [vmem:[%s1] sm:$0xff]
        %vm230 = vcmask 64512
        %v232 = vsel %vm230, %v221, 0
        %v235 = vsel %vm230, %v222, 0
        %v238 = vsel %vm230, %v223, 0
        %v241 = vsel %vm230, %v224, 0
        %v244 = vsel %vm230, %v225, 0
        %v247 = vsel %vm230, %v226, 0
        %v250 = vsel %vm230, %v227, 0
        %v253 = vsel %vm230, %v228, 0
        %255 = vmatprep.subr.mxu0 0.0
        %256 = vmatpush1.msra.mxu0 %v229
        %257 = vmatprep.subr.mxu0 0.0
        %258 = vmatpush1.msra.mxu0 0.0
        %259 = vmatprep.subr.mxu0 0.0
        %260 = vmatpush1.msra.mxu0 0.0
        %261 = vmatprep.subr.mxu0 0.0
        %262 = vmatpush1.msra.mxu0 0.0
        %263 = vmatprep.subr.mxu0 0.0
        %264 = vmatpush1.msra.mxu0 0.0
        %265 = vmatprep.subr.mxu0 0.0
        %266 = vmatpush1.msra.mxu0 0.0
        %267 = vmatprep.subr.mxu0 0.0
        %268 = vmatpush1.msra.mxu0 0.0
        %269 = vmatprep.subr.mxu0 0.0
        %270 = vmatpush1.msra.mxu0 0.0
        %271 = vmatprep.subr.mxu0 0.0
        %272 = vmatpush1.msra.mxu0 0.0
        %273 = vmatprep.subr.mxu0 0.0
        %274 = vmatpush1.msra.mxu0 0.0
        %275 = vmatprep.subr.mxu0 0.0
        %276 = vmatpush1.msra.mxu0 0.0
        %277 = vmatprep.subr.mxu0 0.0
        %278 = vmatpush1.msra.mxu0 0.0
        %279 = vmatprep.subr.mxu0 0.0
        %280 = vmatpush1.msra.mxu0 0.0
        %281 = vmatprep.subr.mxu0 0.0
        %282 = vmatpush1.msra.mxu0 0.0
        %283 = vmatprep.subr.mxu0 0.0
        %284 = vmatpush1.msra.mxu0 0.0
        %285 = vmatprep.subr.mxu0 0.0
        %286 = vmatpush1.msra.mxu0 0.0
        %287 = vmatprep.subr.mxu0 0.0
        %288 = vmatpush1.msra.mxu0 0.0
        %289 = vmatprep.subr.mxu0 0.0
        %290 = vmatpush1.msra.mxu0 0.0
        %291 = vmatprep.subr.mxu0 0.0
        %292 = vmatpush1.msra.mxu0 0.0
        %293 = vmatprep.subr.mxu0 0.0
        %294 = vmatpush1.msra.mxu0 0.0
        %295 = vmatprep.subr.mxu0 0.0
        %296 = vmatpush1.msra.mxu0 0.0
        %297 = vmatprep.subr.mxu0 0.0
        %298 = vmatpush1.msra.mxu0 0.0
        %299 = vmatprep.subr.mxu0 0.0
        %300 = vmatpush1.msra.mxu0 0.0
        %301 = vmatprep.subr.mxu0 0.0
        %302 = vmatpush1.msra.mxu0 0.0
        %303 = vmatprep.subr.mxu0 0.0
        %304 = vmatpush1.msra.mxu0 0.0
        %305 = vmatprep.subr.mxu0 0.0
        %306 = vmatpush1.msra.mxu0 0.0
        %307 = vmatprep.subr.mxu0 0.0
        %308 = vmatpush1.msra.mxu0 0.0
        %309 = vmatprep.subr.mxu0 0.0
        %310 = vmatpush1.msra.mxu0 0.0
        %311 = vmatprep.subr.mxu0 0.0
        %312 = vmatpush1.msra.mxu0 0.0
        %313 = vmatprep.subr.mxu0 0.0
        %314 = vmatpush1.msra.mxu0 0.0
        %315 = vmatprep.subr.mxu0 0.0
        %316 = vmatpush1.msra.mxu0 0.0
        %317 = vmatprep.subr.mxu0 0.0
        %318 = vmatpush1.msra.mxu0 0.0
        %319 = vmatprep.mubr.f32.mxu0 0.0
        %320 = vmatmul.mubr.f32.gmra.mrb[0].mxu0 %v232
        %v321 = vpop.f32.mrb[0].mxu0
        %v322 = vadd.f32 0.0, %v321
        %v323 = vpop.f32.mrb[0].mxu0
        %324 = vmatprep.mubr.f32.mxu0 0.0
        %325 = vmatmul.mubr.f32.gmra.mrb[0].mxu0 %v235
        %v326 = vpop.f32.mrb[0].mxu0
        %v327 = vadd.f32 0.0, %v326
        %v328 = vpop.f32.mrb[0].mxu0
        %329 = vmatprep.mubr.f32.mxu0 0.0
        %330 = vmatmul.mubr.f32.gmra.mrb[0].mxu0 %v238
        %v331 = vpop.f32.mrb[0].mxu0
        %v332 = vadd.f32 0.0, %v331
        %v333 = vpop.f32.mrb[0].mxu0
        %334 = vmatprep.mubr.f32.mxu0 0.0
        %335 = vmatmul.mubr.f32.gmra.mrb[0].mxu0 %v241
        %v336 = vpop.f32.mrb[0].mxu0
        %v337 = vadd.f32 0.0, %v336
        %v338 = vpop.f32.mrb[0].mxu0
        %339 = vmatprep.mubr.f32.mxu0 0.0
        %340 = vmatmul.mubr.f32.gmra.mrb[0].mxu0 %v244
        %v341 = vpop.f32.mrb[0].mxu0
        %v342 = vadd.f32 0.0, %v341
        %v343 = vpop.f32.mrb[0].mxu0
        %344 = vmatprep.mubr.f32.mxu0 0.0
        %345 = vmatmul.mubr.f32.gmra.mrb[0].mxu0 %v247
        %v346 = vpop.f32.mrb[0].mxu0
        %v347 = vadd.f32 0.0, %v346
        %v348 = vpop.f32.mrb[0].mxu0
        %349 = vmatprep.mubr.f32.mxu0 0.0
        %350 = vmatmul.mubr.f32.gmra.mrb[0].mxu0 %v250
        %v351 = vpop.f32.mrb[0].mxu0
        %v352 = vadd.f32 0.0, %v351
        %v353 = vpop.f32.mrb[0].mxu0
        %354 = vmatprep.mubr.f32.mxu0 0.0
        %355 = vmatmul.mubr.f32.gmra.mrb[0].mxu0 %v253
        %v356 = vpop.f32.mrb[0].mxu0
        %v357 = vadd.f32 0.0, %v356
        %v358 = vpop.f32.mrb[0].mxu0
        %359 = vdwg.mxu0
        %vm360 = vcmask 261120
        %361 = vst.msk [vmem:[%s217] sm:$0xff] %vm360, %v322
        %362 = vst.msk [vmem:[%s217 + $0x8] sm:$0xff] %vm360, %v327
        %363 = vst.msk [vmem:[%s217 + $0x10] sm:$0xff] %vm360, %v332
        %364 = vst.msk [vmem:[%s217 + $0x18] sm:$0xff] %vm360, %v337
        %365 = vst.msk [vmem:[%s217 + $0x20] sm:$0xff] %vm360, %v342
        %366 = vst.msk [vmem:[%s217 + $0x28] sm:$0xff] %vm360, %v347
        %367 = vst.msk [vmem:[%s217 + $0x30] sm:$0xff] %vm360, %v352
        %368 = vst.msk [vmem:[%s217 + $0x38] sm:$0xff] %vm360, %v357
        %v369 = vsel %vm360, %v322, 0.0
        %v370 = vsel %vm360, %v327, 0.0
        %v371 = vadd.f32 %v369, %v370
        %v372 = vsel %vm360, %v332, 0.0
        %v373 = vadd.f32 %v371, %v372
        %v374 = vsel %vm360, %v337, 0.0
        %v375 = vadd.f32 %v373, %v374
        %v376 = vsel %vm360, %v342, 0.0
        %v377 = vadd.f32 %v375, %v376
        %v378 = vsel %vm360, %v347, 0.0
        %v379 = vadd.f32 %v377, %v378
        %v380 = vsel %vm360, %v352, 0.0
        %v381 = vadd.f32 %v379, %v380
        %v382 = vsel %vm360, %v357, 0.0
        %v383 = vadd.f32 %v381, %v382
        %v384 = vrot.slane %v383, 4
        %v385 = vadd.f32 %v383, %v384
        %v386 = vrot.slane %v385, 2
        %v387 = vadd.f32 %v385, %v386
        %v388 = vrot.slane %v387, 1
        %v389 = vadd.f32 %v387, %v388
        %v390 = vmul.f32 %v322, %v322
        %v391 = vmul.f32 %v327, %v327
        %v392 = vmul.f32 %v332, %v332
        %v393 = vmul.f32 %v337, %v337
        %v394 = vmul.f32 %v342, %v342
        %v395 = vmul.f32 %v347, %v347
        %v396 = vmul.f32 %v352, %v352
        %v397 = vmul.f32 %v357, %v357
        %v398 = vsel %vm360, %v390, 0.0
        %v399 = vsel %vm360, %v391, 0.0
        %v400 = vadd.f32 %v398, %v399
        %v401 = vsel %vm360, %v392, 0.0
        %v402 = vadd.f32 %v400, %v401
        %v403 = vsel %vm360, %v393, 0.0
        %v404 = vadd.f32 %v402, %v403
        %v405 = vsel %vm360, %v394, 0.0
        %v406 = vadd.f32 %v404, %v405
        %v407 = vsel %vm360, %v395, 0.0
        %v408 = vadd.f32 %v406, %v407
        %v409 = vsel %vm360, %v396, 0.0
        %v410 = vadd.f32 %v408, %v409
        %v411 = vsel %vm360, %v397, 0.0
        %v412 = vadd.f32 %v410, %v411
        %v413 = vrot.slane %v412, 4
        %v414 = vadd.f32 %v412, %v413
        %v415 = vrot.slane %v414, 2
        %v416 = vadd.f32 %v414, %v415
        %v417 = vrot.slane %v416, 1
        %v418 = vadd.f32 %v416, %v417
        %vm419 = vcmask 1040384
        %v420 = vsel %vm419, %v389, %v418
        %p421 = scmp.eq.s32.totalorder %s23, 0
        // Predicated region
        $region29: #{tpu_custom_call.1} parent=27 // pred_check
          %p422 = pneg %p421
        $region30: #{tpu_custom_call.1} parent=27 // pred_check_branch
          %424 = sbr.rel (%p422) target = $region32
        $region31: #{tpu_custom_call.1} parent=27 // pred_region
          %vm425 = vcmask 254976
          %426 = vst.msk [vmem:[%s200] sm:$0x3] %vm425, 0.0
        $region32: #{tpu_custom_call.1} parent=27 // pred_fallthru
          _
        %v427 = vld [vmem:[%s200] sm:$0x3]
        %v428 = vadd.f32 %v427, %v420
        %vm429 = vcmask 254976
        %430 = vst.msk [vmem:[%s200] sm:$0x3] %vm429, %v428
        %s431 = smul.u32 %s22, 5
        %s432 = sadd.s32 %s431, %s23
        %s433 = smul.u32 8, %s432
        %p434 = scmp.lt.s32.totalorder %s433, 79
        %s435 = scalar_select %p434, %s433, 79
        %s436 = smul.addr %s435, 8
        %s437 = scalar_lea.vmem %s2, %s436
        %s438 = sand.u32 %s119, 1
        %s439 = scalar_lea.sflag [#allocation3], %s438
        %s440 = sand.u32 %s119, 1
        %s441 = smul.addr %s440, 2
        %s442 = scalar_lea.vmem [#allocation2], %s441
        // Predicated region
        $region33: #{tpu_custom_call.1} parent=27 // pred_check
          %p443 = pneg %p103
        $region34: #{tpu_custom_call.1} parent=27 // pred_check_branch
          %445 = sbr.rel (%p443) target = $region36
        $region35: #{tpu_custom_call.1} parent=27 // pred_region
          %s446 = smul.u32 %s22, 5
          %s447 = sadd.s32 %s446, %s23
          %s448 = smul.u32 8, %s447
        $region36: #{tpu_custom_call.1} parent=27 // pred_fallthru
          _
        // Predicated region
        $region37: #{tpu_custom_call.1} parent=27 // pred_check
          %p449 = pneg %p129
        $region38: #{tpu_custom_call.1} parent=27 // pred_check_branch
          %451 = sbr.rel (%p449) target = $region40
        $region39: #{tpu_custom_call.1} parent=27 // pred_region
          %s453 = ssub.s32 32, 32
          %454 = vsyncadd %s439, %s453
          %s455 = smul.addr %s22, 32
          %s456 = scalar_lea.hbm %s3, %s455
          %s458 = sshll.u32 %s442, 4
          %s459 = int_to_ptr.vmem [resolvable:$true] %s458
          %461 = dma.vmem_to_hbm [thread:$0]  %s459, 32, %s456, %s439
        $region40: #{tpu_custom_call.1} parent=27 // pred_fallthru
          _
      $region28: #{tpu_custom_call.1} parent=5 // pred_fallthru
        _
      %p462 = scmp.le.s32.totalorder 2, %s13
      // Predicated region
      $region41: #{tpu_custom_call.1} parent=5 // pred_check
        %p463 = pneg %p462
      $region42: #{tpu_custom_call.1} parent=5 // pred_check_branch
        %465 = sbr.rel (%p463) target = $region44
      $region43: #{tpu_custom_call.1} parent=5 // pred_region
        %s466 = ssub.s32 %s13, 2
        // Predicated region
        $region45: #{tpu_custom_call.1} parent=43 // pred_check
          %p467 = pneg %p109
        $region46: #{tpu_custom_call.1} parent=43 // pred_check_branch
          %469 = sbr.rel (%p467) target = $region48
        $region47: #{tpu_custom_call.1} parent=43 // pred_region
          %s470 = smul.u32 %s24, 5
          %s471 = sadd.s32 %s470, %s25
          %s472 = smul.u32 8, %s471
          %p473 = scmp.lt.s32.totalorder %s472, 79
          %s474 = scalar_select %p473, %s472, 79
          %s475 = smul.addr %s474, 8
          %s476 = scalar_lea.vmem %s2, %s475
        $region48: #{tpu_custom_call.1} parent=43 // pred_fallthru
          _
        // Predicated region
        $region49: #{tpu_custom_call.1} parent=43 // pred_check
          %p477 = pneg %p135
        $region50: #{tpu_custom_call.1} parent=43 // pred_check_branch
          %479 = sbr.rel (%p477) target = $region52
        $region51: #{tpu_custom_call.1} parent=43 // pred_region
          %s480 = sand.u32 %s120, 1
          %s481 = scalar_lea.sflag [#allocation3], %s480
          %s482 = sand.u32 %s120, 1
          %s483 = smul.addr %s482, 2
          %s484 = scalar_lea.vmem [#allocation2], %s483
          %485 = dma.done %s481, 32
        $region52: #{tpu_custom_call.1} parent=43 // pred_fallthru
          _
      $region44: #{tpu_custom_call.1} parent=5 // pred_fallthru
        _
    $region6: #{tpu_custom_call.1} parent=1 // loop_footer
      %s17 = sadd.s32 1, %s13
    $region7: #{tpu_custom_call.1} parent=1 // loop_footer_branch
      %12 = sbr.rel target = $region3
    $region8: #{tpu_custom_call.1} parent=1 // loop_exit
      _
    %486 = vsyncpa [#allocation3], 1
    %s487 = scalar_lea.sflag [#allocation3], 1
    %488 = vsyncpa %s487, 1

</llo_original>
